<compile_context>
chip_gen: v7x
topology: tpu7x:2x2x1
jax: 0.10.0
libtpu: 0.0.40
codegen_flags: <defaults>
</compile_context>

<pallas_src>
import warnings

import numpy as np
import jax
import jax.numpy as jnp
from jax.experimental import pallas as pl
from jax.experimental.pallas import tpu as pltpu

warnings.filterwarnings("ignore", message=".*donat.*")  # keep stdout/stderr clean

_LANES = 128                          # vreg lane width: keep the last dim lane-dense
_TARGET_BLOCK_BYTES = 2 * 1024 * 1024  # ~2 MiB blocks: in+out double-buffered = 8 MiB VMEM
_SINGLE_BLOCK_BYTES = 2 * 1024 * 1024  # whole tensor in one block -> skip the grid


def _copy_kernel(x_ref, o_ref):
    o_ref[...] = x_ref[...]


def _sublane_multiple(dtype):
    # second-to-last min-tile dim scales with packing: 8 (f32), 16 (bf16), 32 (int8/fp8)
    return max(8, 32 // jnp.dtype(dtype).itemsize)


def _identity_copy_single_block(x2):
    """Whole array as one ungridded block (full-array block shapes are exempt
    from the (8, 128) divisibility rule)."""
    n_bytes = x2.size * x2.dtype.itemsize
    return pl.pallas_call(
        _copy_kernel,
        out_shape=jax.ShapeDtypeStruct(x2.shape, x2.dtype),
        input_output_aliases={0: 0},
        cost_estimate=pl.CostEstimate(
            flops=0, transcendentals=0, bytes_accessed=2 * n_bytes),
    )(x2)


def _identity_copy_tiled(x2, tile_rows):
    """Streaming copy over a lane-dense (rows, 128) view, ~2 MiB row tiles.

    The last grid block may be partial (rows % tile_rows != 0); Pallas masks
    the boundary itself, so no wrapper-side padding/slicing is needed.
    """
    rows, lanes = x2.shape
    n_bytes = rows * lanes * x2.dtype.itemsize
    return pl.pallas_call(
        _copy_kernel,
        out_shape=jax.ShapeDtypeStruct((rows, lanes), x2.dtype),
        grid_spec=pltpu.PrefetchScalarGridSpec(
            num_scalar_prefetch=0,
            grid=(pl.cdiv(rows, tile_rows),),
            in_specs=[pl.BlockSpec((tile_rows, lanes), lambda i: (i, 0))],
            out_specs=pl.BlockSpec((tile_rows, lanes), lambda i: (i, 0)),
        ),
        input_output_aliases={0: 0},
        compiler_params=pltpu.CompilerParams(
            dimension_semantics=("parallel",)),
        cost_estimate=pl.CostEstimate(
            flops=0, transcendentals=0, bytes_accessed=2 * n_bytes),
    )(x2)


def vgg19_forward(x):
    """VGG_19.forward: returns x unchanged (routed through a Pallas copy kernel)."""
    orig_shape = x.shape
    n = x.size
    if n == 0:
        return x  # empty tensor: nothing to copy

    itemsize = jnp.dtype(x.dtype).itemsize
    total_bytes = n * itemsize
    flat = x.reshape(-1)

    # Fast path: tiny tensor -> one ungridded block, no padding, no grid overhead.
    if total_bytes <= _SINGLE_BLOCK_BYTES:
        if n % _LANES == 0:
            x2 = flat.reshape(n // _LANES, _LANES)
        else:
            x2 = flat.reshape(1, n)  # full-dims block: exempt from (8,128) rule
        return _identity_copy_single_block(x2).reshape(orig_shape)

    # Streaming path: lane-dense (rows, 128) view, ~2 MiB blocks, dtype-aware
    # sublane rounding.
    sub = _sublane_multiple(x.dtype)
    tile_rows = max(sub, (_TARGET_BLOCK_BYTES // (_LANES * itemsize)) // sub * sub)

    if n % _LANES == 0:  # true for all real VGG inputs (N*3*224*224 % 128 == 0)
        rows = n // _LANES
        x2 = flat.reshape(rows, _LANES)
        if rows <= tile_rows:
            out2 = _identity_copy_single_block(x2)
        else:
            out2 = _identity_copy_tiled(x2, tile_rows)
        return out2.reshape(orig_shape)

    # TODO(synk): rare large-and-ragged case (n not a multiple of 128): fall back
    # to a pad + slice path; real VGG inputs never hit this branch.
    rows = pl.cdiv(n, _LANES)
    padded_rows = pl.cdiv(rows, tile_rows) * tile_rows
    pad = padded_rows * _LANES - n
    flat = jnp.pad(flat, (0, pad))
    out2 = _identity_copy_tiled(flat.reshape(padded_rows, _LANES), tile_rows)
    return out2.reshape(-1)[:n].reshape(orig_shape)


if __name__ == "__main__":
    key = jax.random.PRNGKey(0)
    fwd = jax.jit(vgg19_forward, donate_argnums=(0,))

    def _check(shape, dtype=jnp.float32):
        k = jax.random.PRNGKey(0)
        x = jax.random.normal(k, shape, dtype)
        x_host = np.asarray(x)            # host copy (x is donated to the kernel)
        y = jax.block_until_ready(fwd(x))
        assert y.shape == x_host.shape, (y.shape, x_host.shape)
        assert y.dtype == x_host.dtype, (y.dtype, x_host.dtype)
        assert np.array_equal(np.asarray(y), x_host)     # forward(x) == x, bit-exact
        assert np.all(np.isfinite(np.asarray(y)))

    # Primary small VGG-style NCHW input (fast single-block path).
    _check((2, 3, 16, 16))
    # Ragged tiny input (n % 128 != 0 -> (1, n) single block).
    _check((2, 3, 5, 7))
    # Larger input to exercise the tiled streaming path (grid of ~2 MiB blocks,
    # partial last block handled by Pallas).
    _check((4, 3, 224, 224))

    print("KERNEL_OK")
</pallas_src>

<mosaic_0001>
module attributes {stable_mosaic.version = 11 : i64} {
  func.func @_copy_kernel(%arg0: memref<12x128xf32, #tpu.memory_space<vmem>>, %arg1: memref<12x128xf32, #tpu.memory_space<vmem>>) attributes {dimension_semantics = [], scalar_prefetch = 0 : i64, scratch_operands = 0 : i64, tpu.core_type = #tpu.core_type<tc>} {
    %c0 = arith.constant 0 : index
    %c0_0 = arith.constant 0 : index
    %0 = vector.load %arg0[%c0, %c0_0] : memref<12x128xf32, #tpu.memory_space<vmem>>, vector<12x128xf32>
    %c0_1 = arith.constant 0 : index
    %c0_2 = arith.constant 0 : index
    %1 = vector.load %arg1[%c0_1, %c0_2] : memref<12x128xf32, #tpu.memory_space<vmem>>, vector<12x128xf32>
    tpu.vector_store %arg1[%c0_1, %c0_2], %0 {strides = array<i32>} : memref<12x128xf32, #tpu.memory_space<vmem>>, vector<12x128xf32>,
    return
  }
}

</mosaic_0001>

<llo_original>
// kernel: vgg19_forward.1
$region0: #{vgg19_forward.1}
  #allocation0 [shape = 'u32[]', space=smem, size = 0x4, offset = 0x4, fixed_abs, tag = 'smem constant byte address 0x4 - core index']
  #allocation1 [shape = 'u32[144,128]{1,0:T(1,128)}', space=vmem, size = 0x12000, scoped, tag = 'internal scratch']
  %s0 = inlined_call_operand.vmem [shape: f32[12,128], index: 0, kind: input, shape index: {}, may-alias: {0,1}]
  %s1 = inlined_call_operand.vmem [shape: f32[12,128], index: 1, kind: output, shape index: {}, may-alias: {0,1}]
  %s2 = sld [smem:[#allocation0]]
  $region14: #{vgg19_forward.1} parent=0
    _
  %s4 = ssub.s32 1, %s2
  %s5 = scalar_select 0, %s4, %s2
  // Predicated region
  $region2: #{vgg19_forward.1} parent=0 // pred_check
    _
  $region3: #{vgg19_forward.1} parent=0 // pred_check_branch
    %7 = sbr.rel (0) target = $region5
  $region4: #{vgg19_forward.1} parent=0 // pred_region
    _
  $region5: #{vgg19_forward.1} parent=0 // pred_fallthru
    _
  %v8 = vld [vmem:[%s0] sm:$0xff]
  %v9 = vld [vmem:[%s0 + $0x8] sm:$0xf]
  %10 = vst [vmem:[%s1] sm:$0xff] %v8
  %11 = vst [vmem:[%s1 + $0x8] sm:$0xf] %v9
  // Predicated region
  $region6: #{vgg19_forward.1} parent=0 // pred_check
    _
  $region7: #{vgg19_forward.1} parent=0 // pred_check_branch
    %13 = sbr.rel (0) target = $region9
  $region8: #{vgg19_forward.1} parent=0 // pred_region
    _
  $region9: #{vgg19_forward.1} parent=0 // pred_fallthru
    _
  // Predicated region
  $region10: #{vgg19_forward.1} parent=0 // pred_check
    _
  $region11: #{vgg19_forward.1} parent=0 // pred_check_branch
    %15 = sbr.rel (0) target = $region13
  $region12: #{vgg19_forward.1} parent=0 // pred_region
    _
  $region13: #{vgg19_forward.1} parent=0 // pred_fallthru
    _

</llo_original>
